<compile_context>
chip_gen: v5e
topology: v5e:2x2
jax: 0.10.0
libtpu: 0.0.40
codegen_flags: <defaults>
</compile_context>

<pallas_src>
import functools

import jax
import jax.numpy as jnp
from jax.experimental import pallas as pl
from jax.experimental.pallas import tpu as pltpu

# ---------------- model hyperparameters (from Net.__init__) ----------------
N_FEATURE = 1
N_HIDDEN = 10
N_OUTPUT = 1

LANES = 128                      # batch maps to the lane axis
SUBLANES = 8
N_PARAMS = 3 * N_HIDDEN + 1      # w1(10) | b1(10) | w2(10) | b2(1)
PARAM_PAD = 32                   # small pad for a tidy SMEM allocation


def _mlp_kernel(params_ref, x_ref, o_ref):
    """out = b2 + sum_j w2[j] * relu(x * w1[j] + b1[j]) — fully unrolled on the VPU.

    params_ref: SMEM (PARAM_PAD,) f32, layout [w1(10) | b1(10) | w2(10) | b2(1) | pad]
    x_ref/o_ref: VMEM (block_rows, 128) f32; each element is one batch sample.
    """
    x = x_ref[...]
    acc = jnp.zeros_like(x)
    for j in range(N_HIDDEN):  # static trip count -> unrolled at trace time
        w1j = params_ref[j]
        b1j = params_ref[N_HIDDEN + j]
        w2j = params_ref[2 * N_HIDDEN + j]
        acc = acc + w2j * jnp.maximum(x * w1j + b1j, 0.0)
    o_ref[...] = acc + params_ref[3 * N_HIDDEN]   # + b2


def pack_params(w1, b1, w2, b2):
    """Pack the 31 real scalars into one (PARAM_PAD,) f32 array (done once)."""
    p = jnp.concatenate([
        jnp.reshape(w1, (N_HIDDEN,)).astype(jnp.float32),   # w1[0, j]
        jnp.reshape(b1, (N_HIDDEN,)).astype(jnp.float32),
        jnp.reshape(w2, (N_HIDDEN,)).astype(jnp.float32),   # w2[j, 0]
        jnp.reshape(b2, (N_OUTPUT,)).astype(jnp.float32),
    ])
    return jnp.pad(p, (0, PARAM_PAD - N_PARAMS))


@functools.partial(jax.jit, static_argnames=("block_rows",))
def net_forward(x, params, *, block_rows=512):
    """x: (B, 1) float32, params: packed (PARAM_PAD,) f32. Returns (B, 1) float32."""
    B = x.shape[0]

    # batch-in-lanes layout: pad B up to rows_padded * 128 elements
    rows = -(-B // LANES)                                   # ceil(B / 128)
    rows_up = -(-rows // SUBLANES) * SUBLANES               # multiple of 8
    tb = min(block_rows, rows_up)                           # tile rows (mult of 8)
    rows_padded = -(-rows_up // tb) * tb
    total = rows_padded * LANES

    x_flat = jnp.pad(x.reshape(B).astype(jnp.float32), (0, total - B))
    x2d = x_flat.reshape(rows_padded, LANES)

    out2d = pl.pallas_call(
        _mlp_kernel,
        out_shape=jax.ShapeDtypeStruct((rows_padded, LANES), jnp.float32),
        grid=(rows_padded // tb,),
        in_specs=[
            # packed parameters: whole array, resident in SMEM across all steps
            pl.BlockSpec(memory_space=pltpu.MemorySpace.SMEM),
            # activations: (tb, 128) lane-dense tiles, pipelined over the batch
            pl.BlockSpec((tb, LANES), lambda i: (i, 0)),
        ],
        out_specs=pl.BlockSpec((tb, LANES), lambda i: (i, 0)),
        compiler_params=pltpu.CompilerParams(
            dimension_semantics=("parallel",),          # shards across v7x's 2 TCs
            vmem_limit_bytes=32 * 1024 * 1024,          # small per-step working set
        ),
    )(params, x2d)

    return out2d.reshape(total)[:B].reshape(B, N_OUTPUT)


def init_params(key):
    """Mimics torch.nn.Linear default init: U(-1/sqrt(fan_in), 1/sqrt(fan_in)).

    Weights in (in_features, out_features) layout (transpose of PyTorch's)."""
    k1, k2, k3, k4 = jax.random.split(key, 4)
    bound1 = 1.0 / jnp.sqrt(float(N_FEATURE))
    bound2 = 1.0 / jnp.sqrt(float(N_HIDDEN))
    w1 = jax.random.uniform(k1, (N_FEATURE, N_HIDDEN), jnp.float32, -bound1, bound1)
    b1 = jax.random.uniform(k2, (N_HIDDEN,), jnp.float32, -bound1, bound1)
    w2 = jax.random.uniform(k3, (N_HIDDEN, N_OUTPUT), jnp.float32, -bound2, bound2)
    b2 = jax.random.uniform(k4, (N_OUTPUT,), jnp.float32, -bound2, bound2)
    return w1, b1, w2, b2


if __name__ == "__main__":
    key = jax.random.PRNGKey(0)
    w1, b1, w2, b2 = init_params(key)
    params = pack_params(w1, b1, w2, b2)   # packed once, reused across calls

    # same input as the demo: x = unsqueeze(linspace(-1, 1, 1000), dim=1)
    B = 1000
    x = jnp.linspace(-1.0, 1.0, B, dtype=jnp.float32).reshape(B, 1)

    out = net_forward(x, params)
    out = jax.block_until_ready(out)

    # reference in plain JAX (exact f32 math, same as the PyTorch forward)
    h = jnp.maximum(jnp.dot(x, w1, precision=jax.lax.Precision.HIGHEST) + b1, 0.0)
    ref = jnp.dot(h, w2, precision=jax.lax.Precision.HIGHEST) + b2

    assert out.shape == (B, N_OUTPUT)
    assert jnp.allclose(out, ref, atol=1e-5, rtol=1e-5), float(
        jnp.max(jnp.abs(out - ref)))

    print("KERNEL_OK")
</pallas_src>

<mosaic_0001>
module attributes {stable_mosaic.version = 11 : i64} {
  func.func @_mlp_kernel(%arg0: i32, %arg1: memref<32xf32, #tpu.memory_space<smem>>, %arg2: memref<8x128xf32, #tpu.memory_space<vmem>>, %arg3: memref<8x128xf32, #tpu.memory_space<vmem>>) attributes {dimension_semantics = [#tpu.dimension_semantics<parallel>], iteration_bounds = array<i64: 1>, scalar_prefetch = 0 : i64, scratch_operands = 0 : i64, tpu.core_type = #tpu.core_type<tc>, window_params = [{transform_indices = @transform_0, window_bounds = array<i64: 32>}, {transform_indices = @transform_1, window_bounds = array<i64: 8, 128>}, {transform_indices = @transform_2, window_bounds = array<i64: 8, 128>}]} {
    %c0 = arith.constant 0 : index
    %c0_0 = arith.constant 0 : index
    %0 = vector.load %arg2[%c0, %c0_0] : memref<8x128xf32, #tpu.memory_space<vmem>>, vector<8x128xf32>
    %cst = arith.constant 0.000000e+00 : f32
    %1 = vector.broadcast %cst : f32 to vector<8x128xf32>
    %c0_1 = arith.constant 0 : index
    %2 = memref.load %arg1[%c0_1] : memref<32xf32, #tpu.memory_space<smem>>
    %c10 = arith.constant 10 : index
    %3 = memref.load %arg1[%c10] : memref<32xf32, #tpu.memory_space<smem>>
    %c20 = arith.constant 20 : index
    %4 = memref.load %arg1[%c20] : memref<32xf32, #tpu.memory_space<smem>>
    %5 = vector.broadcast %2 : f32 to vector<8x128xf32>
    %6 = arith.mulf %0, %5 : vector<8x128xf32>
    %7 = vector.broadcast %3 : f32 to vector<8x128xf32>
    %8 = arith.addf %6, %7 : vector<8x128xf32>
    %cst_2 = arith.constant 0.000000e+00 : f32
    %9 = vector.broadcast %cst_2 : f32 to vector<8x128xf32>
    %10 = arith.maximumf %8, %9 : vector<8x128xf32>
    %11 = vector.broadcast %4 : f32 to vector<8x128xf32>
    %12 = arith.mulf %11, %10 : vector<8x128xf32>
    %13 = arith.addf %1, %12 : vector<8x128xf32>
    %c1 = arith.constant 1 : index
    %14 = memref.load %arg1[%c1] : memref<32xf32, #tpu.memory_space<smem>>
    %c11 = arith.constant 11 : index
    %15 = memref.load %arg1[%c11] : memref<32xf32, #tpu.memory_space<smem>>
    %c21 = arith.constant 21 : index
    %16 = memref.load %arg1[%c21] : memref<32xf32, #tpu.memory_space<smem>>
    %17 = vector.broadcast %14 : f32 to vector<8x128xf32>
    %18 = arith.mulf %0, %17 : vector<8x128xf32>
    %19 = vector.broadcast %15 : f32 to vector<8x128xf32>
    %20 = arith.addf %18, %19 : vector<8x128xf32>
    %cst_3 = arith.constant 0.000000e+00 : f32
    %21 = vector.broadcast %cst_3 : f32 to vector<8x128xf32>
    %22 = arith.maximumf %20, %21 : vector<8x128xf32>
    %23 = vector.broadcast %16 : f32 to vector<8x128xf32>
    %24 = arith.mulf %23, %22 : vector<8x128xf32>
    %25 = arith.addf %13, %24 : vector<8x128xf32>
    %c2 = arith.constant 2 : index
    %26 = memref.load %arg1[%c2] : memref<32xf32, #tpu.memory_space<smem>>
    %c12 = arith.constant 12 : index
    %27 = memref.load %arg1[%c12] : memref<32xf32, #tpu.memory_space<smem>>
    %c22 = arith.constant 22 : index
    %28 = memref.load %arg1[%c22] : memref<32xf32, #tpu.memory_space<smem>>
    %29 = vector.broadcast %26 : f32 to vector<8x128xf32>
    %30 = arith.mulf %0, %29 : vector<8x128xf32>
    %31 = vector.broadcast %27 : f32 to vector<8x128xf32>
    %32 = arith.addf %30, %31 : vector<8x128xf32>
    %cst_4 = arith.constant 0.000000e+00 : f32
    %33 = vector.broadcast %cst_4 : f32 to vector<8x128xf32>
    %34 = arith.maximumf %32, %33 : vector<8x128xf32>
    %35 = vector.broadcast %28 : f32 to vector<8x128xf32>
    %36 = arith.mulf %35, %34 : vector<8x128xf32>
    %37 = arith.addf %25, %36 : vector<8x128xf32>
    %c3 = arith.constant 3 : index
    %38 = memref.load %arg1[%c3] : memref<32xf32, #tpu.memory_space<smem>>
    %c13 = arith.constant 13 : index
    %39 = memref.load %arg1[%c13] : memref<32xf32, #tpu.memory_space<smem>>
    %c23 = arith.constant 23 : index
    %40 = memref.load %arg1[%c23] : memref<32xf32, #tpu.memory_space<smem>>
    %41 = vector.broadcast %38 : f32 to vector<8x128xf32>
    %42 = arith.mulf %0, %41 : vector<8x128xf32>
    %43 = vector.broadcast %39 : f32 to vector<8x128xf32>
    %44 = arith.addf %42, %43 : vector<8x128xf32>
    %cst_5 = arith.constant 0.000000e+00 : f32
    %45 = vector.broadcast %cst_5 : f32 to vector<8x128xf32>
    %46 = arith.maximumf %44, %45 : vector<8x128xf32>
    %47 = vector.broadcast %40 : f32 to vector<8x128xf32>
    %48 = arith.mulf %47, %46 : vector<8x128xf32>
    %49 = arith.addf %37, %48 : vector<8x128xf32>
    %c4 = arith.constant 4 : index
    %50 = memref.load %arg1[%c4] : memref<32xf32, #tpu.memory_space<smem>>
    %c14 = arith.constant 14 : index
    %51 = memref.load %arg1[%c14] : memref<32xf32, #tpu.memory_space<smem>>
    %c24 = arith.constant 24 : index
    %52 = memref.load %arg1[%c24] : memref<32xf32, #tpu.memory_space<smem>>
    %53 = vector.broadcast %50 : f32 to vector<8x128xf32>
    %54 = arith.mulf %0, %53 : vector<8x128xf32>
    %55 = vector.broadcast %51 : f32 to vector<8x128xf32>
    %56 = arith.addf %54, %55 : vector<8x128xf32>
    %cst_6 = arith.constant 0.000000e+00 : f32
    %57 = vector.broadcast %cst_6 : f32 to vector<8x128xf32>
    %58 = arith.maximumf %56, %57 : vector<8x128xf32>
    %59 = vector.broadcast %52 : f32 to vector<8x128xf32>
    %60 = arith.mulf %59, %58 : vector<8x128xf32>
    %61 = arith.addf %49, %60 : vector<8x128xf32>
    %c5 = arith.constant 5 : index
    %62 = memref.load %arg1[%c5] : memref<32xf32, #tpu.memory_space<smem>>
    %c15 = arith.constant 15 : index
    %63 = memref.load %arg1[%c15] : memref<32xf32, #tpu.memory_space<smem>>
    %c25 = arith.constant 25 : index
    %64 = memref.load %arg1[%c25] : memref<32xf32, #tpu.memory_space<smem>>
    %65 = vector.broadcast %62 : f32 to vector<8x128xf32>
    %66 = arith.mulf %0, %65 : vector<8x128xf32>
    %67 = vector.broadcast %63 : f32 to vector<8x128xf32>
    %68 = arith.addf %66, %67 : vector<8x128xf32>
    %cst_7 = arith.constant 0.000000e+00 : f32
    %69 = vector.broadcast %cst_7 : f32 to vector<8x128xf32>
    %70 = arith.maximumf %68, %69 : vector<8x128xf32>
    %71 = vector.broadcast %64 : f32 to vector<8x128xf32>
    %72 = arith.mulf %71, %70 : vector<8x128xf32>
    %73 = arith.addf %61, %72 : vector<8x128xf32>
    %c6 = arith.constant 6 : index
    %74 = memref.load %arg1[%c6] : memref<32xf32, #tpu.memory_space<smem>>
    %c16 = arith.constant 16 : index
    %75 = memref.load %arg1[%c16] : memref<32xf32, #tpu.memory_space<smem>>
    %c26 = arith.constant 26 : index
    %76 = memref.load %arg1[%c26] : memref<32xf32, #tpu.memory_space<smem>>
    %77 = vector.broadcast %74 : f32 to vector<8x128xf32>
    %78 = arith.mulf %0, %77 : vector<8x128xf32>
    %79 = vector.broadcast %75 : f32 to vector<8x128xf32>
    %80 = arith.addf %78, %79 : vector<8x128xf32>
    %cst_8 = arith.constant 0.000000e+00 : f32
    %81 = vector.broadcast %cst_8 : f32 to vector<8x128xf32>
    %82 = arith.maximumf %80, %81 : vector<8x128xf32>
    %83 = vector.broadcast %76 : f32 to vector<8x128xf32>
    %84 = arith.mulf %83, %82 : vector<8x128xf32>
    %85 = arith.addf %73, %84 : vector<8x128xf32>
    %c7 = arith.constant 7 : index
    %86 = memref.load %arg1[%c7] : memref<32xf32, #tpu.memory_space<smem>>
    %c17 = arith.constant 17 : index
    %87 = memref.load %arg1[%c17] : memref<32xf32, #tpu.memory_space<smem>>
    %c27 = arith.constant 27 : index
    %88 = memref.load %arg1[%c27] : memref<32xf32, #tpu.memory_space<smem>>
    %89 = vector.broadcast %86 : f32 to vector<8x128xf32>
    %90 = arith.mulf %0, %89 : vector<8x128xf32>
    %91 = vector.broadcast %87 : f32 to vector<8x128xf32>
    %92 = arith.addf %90, %91 : vector<8x128xf32>
    %cst_9 = arith.constant 0.000000e+00 : f32
    %93 = vector.broadcast %cst_9 : f32 to vector<8x128xf32>
    %94 = arith.maximumf %92, %93 : vector<8x128xf32>
    %95 = vector.broadcast %88 : f32 to vector<8x128xf32>
    %96 = arith.mulf %95, %94 : vector<8x128xf32>
    %97 = arith.addf %85, %96 : vector<8x128xf32>
    %c8 = arith.constant 8 : index
    %98 = memref.load %arg1[%c8] : memref<32xf32, #tpu.memory_space<smem>>
    %c18 = arith.constant 18 : index
    %99 = memref.load %arg1[%c18] : memref<32xf32, #tpu.memory_space<smem>>
    %c28 = arith.constant 28 : index
    %100 = memref.load %arg1[%c28] : memref<32xf32, #tpu.memory_space<smem>>
    %101 = vector.broadcast %98 : f32 to vector<8x128xf32>
    %102 = arith.mulf %0, %101 : vector<8x128xf32>
    %103 = vector.broadcast %99 : f32 to vector<8x128xf32>
    %104 = arith.addf %102, %103 : vector<8x128xf32>
    %cst_10 = arith.constant 0.000000e+00 : f32
    %105 = vector.broadcast %cst_10 : f32 to vector<8x128xf32>
    %106 = arith.maximumf %104, %105 : vector<8x128xf32>
    %107 = vector.broadcast %100 : f32 to vector<8x128xf32>
    %108 = arith.mulf %107, %106 : vector<8x128xf32>
    %109 = arith.addf %97, %108 : vector<8x128xf32>
    %c9 = arith.constant 9 : index
    %110 = memref.load %arg1[%c9] : memref<32xf32, #tpu.memory_space<smem>>
    %c19 = arith.constant 19 : index
    %111 = memref.load %arg1[%c19] : memref<32xf32, #tpu.memory_space<smem>>
    %c29 = arith.constant 29 : index
    %112 = memref.load %arg1[%c29] : memref<32xf32, #tpu.memory_space<smem>>
    %113 = vector.broadcast %110 : f32 to vector<8x128xf32>
    %114 = arith.mulf %0, %113 : vector<8x128xf32>
    %115 = vector.broadcast %111 : f32 to vector<8x128xf32>
    %116 = arith.addf %114, %115 : vector<8x128xf32>
    %cst_11 = arith.constant 0.000000e+00 : f32
    %117 = vector.broadcast %cst_11 : f32 to vector<8x128xf32>
    %118 = arith.maximumf %116, %117 : vector<8x128xf32>
    %119 = vector.broadcast %112 : f32 to vector<8x128xf32>
    %120 = arith.mulf %119, %118 : vector<8x128xf32>
    %121 = arith.addf %109, %120 : vector<8x128xf32>
    %c30 = arith.constant 30 : index
    %122 = memref.load %arg1[%c30] : memref<32xf32, #tpu.memory_space<smem>>
    %123 = vector.broadcast %122 : f32 to vector<8x128xf32>
    %124 = arith.addf %121, %123 : vector<8x128xf32>
    %c0_12 = arith.constant 0 : index
    %c0_13 = arith.constant 0 : index
    %125 = vector.load %arg3[%c0_12, %c0_13] : memref<8x128xf32, #tpu.memory_space<vmem>>, vector<8x128xf32>
    tpu.vector_store %arg3[%c0_12, %c0_13], %124 {strides = array<i32>} : memref<8x128xf32, #tpu.memory_space<vmem>>, vector<8x128xf32>,
    return
  }
  func.func @transform_0(%arg0: i32) -> i32 {
    %c0_i32 = arith.constant 0 : i32
    %c0_i32_0 = arith.constant 0 : i32
    return %c0_i32 : i32
  }
  func.func @transform_1(%arg0: i32) -> (i32, i32) {
    %c0_i32 = arith.constant 0 : i32
    %c0_i32_0 = arith.constant 0 : i32
    return %arg0, %c0_i32 : i32, i32
  }
  func.func @transform_2(%arg0: i32) -> (i32, i32) {
    %c0_i32 = arith.constant 0 : i32
    %c0_i32_0 = arith.constant 0 : i32
    return %arg0, %c0_i32 : i32, i32
  }
}

</mosaic_0001>

<llo_original>
// kernel: net_forward.1
$region0: #{net_forward.1}
  #allocation0 [shape = 'u32[]', space=smem, size = 0x4, offset = 0x4, fixed_abs, tag = 'smem constant byte address 0x4 - core index']
  #allocation1 [shape = 'u32[72,128]{1,0:T(1,128)}', space=vmem, size = 0x9000, scoped, tag = 'internal scratch']
  %s0 = inlined_call_operand.vmem [shape: f32[32], index: 0, kind: input, shape index: {}]
  %s1 = inlined_call_operand.vmem [shape: f32[8,128], index: 1, kind: input, shape index: {}]
  %s2 = inlined_call_operand.hbm [shape: f32[8,128], index: 2, kind: output, shape index: {}]
  %s3 = sld [smem:[#allocation0]]
  $region22: #{net_forward.1} parent=0
    _
  %s5 = ssub.s32 1, %s3
  %s6 = scalar_select 0, %s5, %s3
  $region1: #{net_forward.1} parent=0
    #allocation2 [shape = 'u8[512]{0}', space=smem, size = 0x200, scoped, tag = 'input window, operand 0, single buffered']
    #allocation3 [shape = 's32[1]{0}', space=sflag, size = 0x4, scoped, tag = 'scoped memory for net_forward.1']
    #allocation4 [shape = 's32[1]{0}', space=sflag, size = 0x4, scoped, tag = 'scoped memory for net_forward.1']
    #allocation5 [shape = 'u8[4096]{0}', space=vmem, size = 0x1000, scoped, tag = 'output window, operand 0, single buffered']
    %7 = vsyncpa [#allocation4], 0
    %8 = vsyncpa [#allocation3], 0
    // Predicated region
    $region2: #{net_forward.1} parent=1 // pred_check
      _
    $region3: #{net_forward.1} parent=1 // pred_check_branch
      %10 = sbr.rel (0) target = $region5
    $region4: #{net_forward.1} parent=1 // pred_region
      %12 = vsyncadd [#allocation4], 0
      %s14 = sshll.u32 %s0, 4
      %s15 = int_to_ptr.vmem [resolvable:$true] %s14
      %17 = dma.vmem_to_smem %s15, 16, [#allocation2], [#allocation4]
    $region5: #{net_forward.1} parent=1 // pred_fallthru
      _
    // Predicated region
    $region6: #{net_forward.1} parent=1 // pred_check
      _
    $region7: #{net_forward.1} parent=1 // pred_check_branch
      %19 = sbr.rel (0) target = $region9
    $region8: #{net_forward.1} parent=1 // pred_region
      _
    $region9: #{net_forward.1} parent=1 // pred_fallthru
      _
    // Predicated region
    $region10: #{net_forward.1} parent=1 // pred_check
      _
    $region11: #{net_forward.1} parent=1 // pred_check_branch
      %21 = sbr.rel (0) target = $region13
    $region12: #{net_forward.1} parent=1 // pred_region
      %23 = dma.done [#allocation4], 16
    $region13: #{net_forward.1} parent=1 // pred_fallthru
      _
    %24 = sfence
    %v25 = vld [vmem:[%s1] sm:$0xff]
    %s26 = sld [smem:[#allocation2]]
    %s27 = sld [smem:[#allocation2 + $0xa]]
    %s28 = sld [smem:[#allocation2 + $0x14]]
    %v29 = vstv %s26
    %v30 = vmul.f32 %v25, %v29
    %v31 = vstv %s27
    %v32 = vadd.f32 %v30, %v31
    %v33 = vmax.f32 %v32, 0.0
    %v34 = vstv %s28
    %v35 = vmul.f32 %v34, %v33
    %v36 = vadd.f32 %v35, 0.0
    %s37 = sld [smem:[#allocation2 + $0x1]]
    %s38 = sld [smem:[#allocation2 + $0xb]]
    %s39 = sld [smem:[#allocation2 + $0x15]]
    %v40 = vstv %s37
    %v41 = vmul.f32 %v25, %v40
    %v42 = vstv %s38
    %v43 = vadd.f32 %v41, %v42
    %v44 = vmax.f32 %v43, 0.0
    %v45 = vstv %s39
    %v46 = vmul.f32 %v45, %v44
    %v47 = vadd.f32 %v36, %v46
    %s48 = sld [smem:[#allocation2 + $0x2]]
    %s49 = sld [smem:[#allocation2 + $0xc]]
    %s50 = sld [smem:[#allocation2 + $0x16]]
    %v51 = vstv %s48
    %v52 = vmul.f32 %v25, %v51
    %v53 = vstv %s49
    %v54 = vadd.f32 %v52, %v53
    %v55 = vmax.f32 %v54, 0.0
    %v56 = vstv %s50
    %v57 = vmul.f32 %v56, %v55
    %v58 = vadd.f32 %v47, %v57
    %s59 = sld [smem:[#allocation2 + $0x3]]
    %s60 = sld [smem:[#allocation2 + $0xd]]
    %s61 = sld [smem:[#allocation2 + $0x17]]
    %v62 = vstv %s59
    %v63 = vmul.f32 %v25, %v62
    %v64 = vstv %s60
    %v65 = vadd.f32 %v63, %v64
    %v66 = vmax.f32 %v65, 0.0
    %v67 = vstv %s61
    %v68 = vmul.f32 %v67, %v66
    %v69 = vadd.f32 %v58, %v68
    %s70 = sld [smem:[#allocation2 + $0x4]]
    %s71 = sld [smem:[#allocation2 + $0xe]]
    %s72 = sld [smem:[#allocation2 + $0x18]]
    %v73 = vstv %s70
    %v74 = vmul.f32 %v25, %v73
    %v75 = vstv %s71
    %v76 = vadd.f32 %v74, %v75
    %v77 = vmax.f32 %v76, 0.0
    %v78 = vstv %s72
    %v79 = vmul.f32 %v78, %v77
    %v80 = vadd.f32 %v69, %v79
    %s81 = sld [smem:[#allocation2 + $0x5]]
    %s82 = sld [smem:[#allocation2 + $0xf]]
    %s83 = sld [smem:[#allocation2 + $0x19]]
    %v84 = vstv %s81
    %v85 = vmul.f32 %v25, %v84
    %v86 = vstv %s82
    %v87 = vadd.f32 %v85, %v86
    %v88 = vmax.f32 %v87, 0.0
    %v89 = vstv %s83
    %v90 = vmul.f32 %v89, %v88
    %v91 = vadd.f32 %v80, %v90
    %s92 = sld [smem:[#allocation2 + $0x6]]
    %s93 = sld [smem:[#allocation2 + $0x10]]
    %s94 = sld [smem:[#allocation2 + $0x1a]]
    %v95 = vstv %s92
    %v96 = vmul.f32 %v25, %v95
    %v97 = vstv %s93
    %v98 = vadd.f32 %v96, %v97
    %v99 = vmax.f32 %v98, 0.0
    %v100 = vstv %s94
    %v101 = vmul.f32 %v100, %v99
    %v102 = vadd.f32 %v91, %v101
    %s103 = sld [smem:[#allocation2 + $0x7]]
    %s104 = sld [smem:[#allocation2 + $0x11]]
    %s105 = sld [smem:[#allocation2 + $0x1b]]
    %v106 = vstv %s103
    %v107 = vmul.f32 %v25, %v106
    %v108 = vstv %s104
    %v109 = vadd.f32 %v107, %v108
    %v110 = vmax.f32 %v109, 0.0
    %v111 = vstv %s105
    %v112 = vmul.f32 %v111, %v110
    %v113 = vadd.f32 %v102, %v112
    %s114 = sld [smem:[#allocation2 + $0x8]]
    %s115 = sld [smem:[#allocation2 + $0x12]]
    %s116 = sld [smem:[#allocation2 + $0x1c]]
    %v117 = vstv %s114
    %v118 = vmul.f32 %v25, %v117
    %v119 = vstv %s115
    %v120 = vadd.f32 %v118, %v119
    %v121 = vmax.f32 %v120, 0.0
    %v122 = vstv %s116
    %v123 = vmul.f32 %v122, %v121
    %v124 = vadd.f32 %v113, %v123
    %s125 = sld [smem:[#allocation2 + $0x9]]
    %s126 = sld [smem:[#allocation2 + $0x13]]
    %s127 = sld [smem:[#allocation2 + $0x1d]]
    %v128 = vstv %s125
    %v129 = vmul.f32 %v25, %v128
    %v130 = vstv %s126
    %v131 = vadd.f32 %v129, %v130
    %v132 = vmax.f32 %v131, 0.0
    %v133 = vstv %s127
    %v134 = vmul.f32 %v133, %v132
    %v135 = vadd.f32 %v124, %v134
    %s136 = sld [smem:[#allocation2 + $0x1e]]
    %v137 = vstv %s136
    %v138 = vadd.f32 %v135, %v137
    %139 = vst [vmem:[#allocation5] sm:$0xff] %v138
    // Predicated region
    $region14: #{net_forward.1} parent=1 // pred_check
      _
    $region15: #{net_forward.1} parent=1 // pred_check_branch
      %141 = sbr.rel (0) target = $region17
    $region16: #{net_forward.1} parent=1 // pred_region
      %143 = vsyncadd [#allocation3], 0
      %s145 = sshll.u32 [#allocation5], 4
      %s146 = int_to_ptr.vmem [resolvable:$true] %s145
      %s147 = sshll.u32 %s2, 4
      %s148 = int_to_ptr.hbm [resolvable:$true] %s147
      %150 = dma.vmem_to_hbm [thread:$0]  %s146, 128, %s148, [#allocation3]
    $region17: #{net_forward.1} parent=1 // pred_fallthru
      _
    // Predicated region
    $region18: #{net_forward.1} parent=1 // pred_check
      _
    $region19: #{net_forward.1} parent=1 // pred_check_branch
      %152 = sbr.rel (0) target = $region21
    $region20: #{net_forward.1} parent=1 // pred_region
      %154 = dma.done [#allocation3], 128
    $region21: #{net_forward.1} parent=1 // pred_fallthru
      _
    %155 = vsyncpa [#allocation3], 1
    %156 = vsyncpa [#allocation4], 1

</llo_original>
